<compile_context>
chip_gen: v7x
topology: tpu7x:2x2x1
jax: 0.10.0
libtpu: 0.0.40
codegen_flags: <defaults>
</compile_context>

<pallas_src>
import jax
import jax.numpy as jnp
import numpy as np
from jax.experimental import pallas as pl
from jax.experimental.pallas import tpu as pltpu

_LANES = 128                 # lane-dense last dim (unmasked vst)
_MAX_ROWS_PER_TILE = 8192    # 8192 x 128 x 4B = 4 MiB per f32 tile
_TARGET_GRID_STEPS = 8       # keep >= ~8 steps so v7x's 2 TCs both get work


def _curriculum_dropout_kernel(scalars_ref, x_ref, o_ref):
    # Scalars prefetched into SMEM before the grid runs: [-gamma, 1-p, p].
    neg_gamma = scalars_ref[0]
    one_minus_p = scalars_ref[1]
    p = scalars_ref[2]

    # Elementwise in f32 (v5e has no bf16 VPU/EUP path); exp -> EUP slot.
    x = x_ref[...].astype(jnp.float32)
    o_ref[...] = (one_minus_p * jnp.exp(neg_gamma * x) + p).astype(o_ref.dtype)


def _row_tile(n_rows, dtype, max_rows_per_tile):
    """Pick a sublane-aligned row tile that yields several grid steps."""
    itemsize = jnp.dtype(dtype).itemsize
    sub = max(8, 32 // itemsize)          # 8 for f32, 16 for bf16, 32 for int8/fp8
    if n_rows <= sub:
        return n_rows                     # full-extent block (always legal)
    tm = pl.cdiv(n_rows, _TARGET_GRID_STEPS)
    tm = ((tm + sub - 1) // sub) * sub    # round up to sublane packing
    tm = max(sub, min(tm, max_rows_per_tile))
    if tm >= n_rows:
        tm = n_rows
    return tm


def _run_tiled(x2, scalars, out_dtype, max_rows_per_tile):
    n_rows = x2.shape[0]
    tm = _row_tile(n_rows, out_dtype, max_rows_per_tile)
    grid = (pl.cdiv(n_rows, tm),)

    return pl.pallas_call(
        _curriculum_dropout_kernel,
        out_shape=jax.ShapeDtypeStruct((n_rows, _LANES), out_dtype),
        grid_spec=pltpu.PrefetchScalarGridSpec(
            num_scalar_prefetch=1,
            grid=grid,
            in_specs=[pl.BlockSpec((tm, _LANES), lambda i, s: (i, 0))],
            out_specs=pl.BlockSpec((tm, _LANES), lambda i, s: (i, 0)),
        ),
        compiler_params=pltpu.CompilerParams(
            dimension_semantics=("parallel",),        # v7x: shard grid over 2 TCs
            vmem_limit_bytes=32 * 1024 * 1024,        # safe on v5e/v6e/v7x
        ),
    )(scalars, x2)


def curriculum_dropout(x, gamma, p, *, rows_per_tile=_MAX_ROWS_PER_TILE):
    """y = (1 - p) * exp(-gamma * x) + p, elementwise over x of any shape."""
    orig_shape = x.shape
    orig_dtype = x.dtype
    total = int(np.prod(orig_shape)) if orig_shape else 1

    gamma_f = jnp.asarray(gamma, jnp.float32)
    p_f = jnp.asarray(p, jnp.float32)
    scalars = jnp.stack([-gamma_f, 1.0 - p_f, p_f])

    xf = x.reshape(-1)
    n_rows = total // _LANES
    rem = total - n_rows * _LANES

    if n_rows == 0:
        # Tiny input (< 128 elems): a kernel launch is pure overhead, use plain jnp.
        out = ((1.0 - p_f) * jnp.exp(-gamma_f * xf.astype(jnp.float32)) + p_f)
        return out.astype(orig_dtype).reshape(orig_shape)

    # 128-aligned prefix through the kernel (reshape of a contiguous flat array is free).
    head = xf if rem == 0 else xf[: n_rows * _LANES]
    head_out = _run_tiled(
        head.reshape(n_rows, _LANES), scalars, orig_dtype, rows_per_tile
    ).reshape(-1)

    if rem == 0:
        out = head_out
    else:
        # <=127-element tail with plain jnp (no whole-array pad/slice copies).
        tail = xf[n_rows * _LANES:].astype(jnp.float32)
        tail_out = ((1.0 - p_f) * jnp.exp(-gamma_f * tail) + p_f).astype(orig_dtype)
        out = jnp.concatenate([head_out, tail_out])

    return out.reshape(orig_shape)


def _reference(x, gamma, p):
    return ((1.0 - p) * jnp.exp(-gamma * x.astype(jnp.float32)) + p).astype(x.dtype)


if __name__ == "__main__":
    key = jax.random.PRNGKey(0)
    gamma = 0.5   # temperature
    p = 0.3       # scheduled probability (e.g. from an ss_prob schedule)

    # Main case: (B, C, H, W) = (2, 4, 16, 16) -> 2048 elems, 128-aligned fast path.
    B, C, H, W = 2, 4, 16, 16
    k1, k2 = jax.random.split(key)
    x = jax.random.normal(k1, (B, C, H, W), dtype=jnp.float32)

    out = jax.block_until_ready(curriculum_dropout(x, gamma, p))
    ref = _reference(x, gamma, p)
    assert out.shape == x.shape and out.dtype == x.dtype
    np.testing.assert_allclose(np.asarray(out), np.asarray(ref), rtol=1e-5, atol=1e-5)

    # Non-128-multiple case: exercises the prefix-kernel + jnp-tail path (no pad/slice).
    x_odd = jax.random.normal(k2, (7, 50), dtype=jnp.float32)   # 350 = 2*128 + 94
    out_odd = jax.block_until_ready(curriculum_dropout(x_odd, gamma, p))
    np.testing.assert_allclose(
        np.asarray(out_odd), np.asarray(_reference(x_odd, gamma, p)),
        rtol=1e-5, atol=1e-5)

    # TODO(synk): the PyTorch eval branch (`return x`) is unreachable because
    # `self.train()` returns the module (truthy); only the training formula is lowered.
    print("KERNEL_OK")
</pallas_src>

<mosaic_0001>
module attributes {stable_mosaic.version = 11 : i64} {
  func.func @_curriculum_dropout_kernel(%arg0: i32, %arg1: memref<3xf32, #tpu.memory_space<smem>>, %arg2: memref<8x128xf32, #tpu.memory_space<vmem>>, %arg3: memref<8x128xf32, #tpu.memory_space<vmem>>) attributes {dimension_semantics = [#tpu.dimension_semantics<parallel>], iteration_bounds = array<i64: 2>, scalar_prefetch = 1 : i64, scratch_operands = 0 : i64, tpu.core_type = #tpu.core_type<tc>, window_params = [{transform_indices = @transform_0, window_bounds = array<i64: 8, 128>}, {transform_indices = @transform_1, window_bounds = array<i64: 8, 128>}]} {
    %c0 = arith.constant 0 : index
    %0 = memref.load %arg1[%c0] : memref<3xf32, #tpu.memory_space<smem>>
    %c1 = arith.constant 1 : index
    %1 = memref.load %arg1[%c1] : memref<3xf32, #tpu.memory_space<smem>>
    %c2 = arith.constant 2 : index
    %2 = memref.load %arg1[%c2] : memref<3xf32, #tpu.memory_space<smem>>
    %c0_0 = arith.constant 0 : index
    %c0_1 = arith.constant 0 : index
    %3 = vector.load %arg2[%c0_0, %c0_1] : memref<8x128xf32, #tpu.memory_space<vmem>>, vector<8x128xf32>
    %4 = vector.broadcast %0 : f32 to vector<8x128xf32>
    %5 = arith.mulf %4, %3 : vector<8x128xf32>
    %6 = math.exp %5 : vector<8x128xf32>
    %7 = vector.broadcast %1 : f32 to vector<8x128xf32>
    %8 = arith.mulf %7, %6 : vector<8x128xf32>
    %9 = vector.broadcast %2 : f32 to vector<8x128xf32>
    %10 = arith.addf %8, %9 : vector<8x128xf32>
    %c0_2 = arith.constant 0 : index
    %c0_3 = arith.constant 0 : index
    %11 = vector.load %arg3[%c0_2, %c0_3] : memref<8x128xf32, #tpu.memory_space<vmem>>, vector<8x128xf32>
    tpu.vector_store %arg3[%c0_2, %c0_3], %10 {strides = array<i32>} : memref<8x128xf32, #tpu.memory_space<vmem>>, vector<8x128xf32>,
    return
  }
  func.func @transform_0(%arg0: i32, %arg1: memref<3xf32, #tpu.memory_space<smem>>) -> (i32, i32) {
    %c0_i32 = arith.constant 0 : i32
    %c0_i32_0 = arith.constant 0 : i32
    return %arg0, %c0_i32 : i32, i32
  }
  func.func @transform_1(%arg0: i32, %arg1: memref<3xf32, #tpu.memory_space<smem>>) -> (i32, i32) {
    %c0_i32 = arith.constant 0 : i32
    %c0_i32_0 = arith.constant 0 : i32
    return %arg0, %c0_i32 : i32, i32
  }
}

</mosaic_0001>

<llo_original>
// kernel: tpu_custom_call.1
$region0: #{tpu_custom_call.1}
  #allocation0 [shape = 'u32[]', space=smem, size = 0x4, offset = 0x4, fixed_abs, tag = 'smem constant byte address 0x4 - core index']
  #allocation1 [shape = 'u32[144,128]{1,0:T(1,128)}', space=vmem, size = 0x12000, scoped, tag = 'internal scratch']
  #allocation2 [shape = 's32[1]{0}', space=sflag, size = 0x4, scoped, tag = 'scoped memory for tpu_custom_call.1']
  #allocation3 [shape = 'u8[512]{0}', space=smem, size = 0x200, scoped, tag = 'prefetched SMEM operand 0']
  %s0 = inlined_call_operand.hbm [shape: f32[3], index: 0, kind: input, shape index: {}]
  %s1 = inlined_call_operand.hbm [shape: f32[16,128], index: 1, kind: input, shape index: {}]
  %s2 = inlined_call_operand.hbm [shape: f32[16,128], index: 2, kind: output, shape index: {}]
  %s3 = sld [smem:[#allocation0]]
  $region41: #{tpu_custom_call.1} parent=0
    _
  %s5 = ssub.s32 1, %s3
  %s6 = scalar_select 0, %s5, %s3
  %8 = dma.hbm_to_smem %s0, 16, [#allocation3], [#allocation2]
  %9 = dma.done [#allocation2], 16
  %10 = sfence
  $region1: #{tpu_custom_call.1} parent=0
    #allocation4 [shape = 'u8[8192]{0}', space=vmem, size = 0x2000, scoped, tag = 'input window, operand 1']
    #allocation5 [shape = 's32[2]{0}', space=sflag, size = 0x8, scoped, tag = 'scoped memory for tpu_custom_call.1']
    #allocation6 [shape = 's32[2]{0}', space=sflag, size = 0x8, scoped, tag = 'scoped memory for tpu_custom_call.1']
    #allocation7 [shape = 'u8[8192]{0}', space=vmem, size = 0x2000, scoped, tag = 'output window, operand 0']
    %11 = vsyncpa [#allocation5], 0
    %s12 = scalar_lea.sflag [#allocation5], 1
    %13 = vsyncpa %s12, 0
    %14 = vsyncpa [#allocation6], 0
    %s15 = scalar_lea.sflag [#allocation6], 1
    %16 = vsyncpa %s15, 0
    loop: start=0, step=1, limit=4
    $region2: #{tpu_custom_call.1} parent=1 // loop_pre_header
      _
    $region3: #{tpu_custom_call.1} parent=1 // loop_header
      %s18 = sphi 0, %s22
      %p19 = scmp.ge.s32.totalorder %s18, 4
      %s28 = sphi 0, %s30
      %s31 = sphi 0, %s28
      %s32 = sphi 0, %s31
      %s48 = sphi 0, %s32
      %s54 = sphi 0, %s56
      %s57 = sphi 0, %s54
      %s58 = sphi 0, %s57
      %s74 = sphi 0, %s58
    $region4: #{tpu_custom_call.1} parent=1 // loop_header_branch
      %21 = sbr.rel (%p19) target = $region8
    $region5: #{tpu_custom_call.1} parent=1 // loop_body
      %s23 = ssub.s32 %s18, 1
      %s24 = ssub.s32 %s18, 2
      %s25 = sadd.s32 %s18, 1
      %s26 = ssub.s32 %s18, %s25
      %p27 = scmp.eq.s32.totalorder %s26, 0
      %s29 = sadd.s32 %s28, 1
      %s30 = scalar_select %p27, %s28, %s29
      %p33 = pneg %p27
      %p34 = scmp.eq.s32.totalorder %s18, 1
      %p35 = por %p33, %p34
      %p36 = scmp.ne.s32.totalorder %s28, %s31
      %p37 = scmp.eq.s32.totalorder %s18, 0
      %p38 = por %p36, %p37
      %p39 = scmp.ne.s32.totalorder %s28, %s31
      %p40 = scmp.eq.s32.totalorder %s23, 1
      %p41 = por %p39, %p40
      %p42 = scmp.ne.s32.totalorder %s31, %s32
      %p43 = scmp.eq.s32.totalorder %s23, 0
      %p44 = por %p42, %p43
      %p45 = scmp.ne.s32.totalorder %s31, %s32
      %p46 = scmp.eq.s32.totalorder %s24, 1
      %p47 = por %p45, %p46
      %p49 = scmp.ne.s32.totalorder %s32, %s48
      %p50 = scmp.eq.s32.totalorder %s24, 0
      %p51 = por %p49, %p50
      %s52 = ssub.s32 %s18, %s25
      %p53 = scmp.eq.s32.totalorder %s52, 0
      %s55 = sadd.s32 %s54, 1
      %s56 = scalar_select %p53, %s54, %s55
      %p59 = pneg %p53
      %p60 = scmp.eq.s32.totalorder %s18, 1
      %p61 = por %p59, %p60
      %p62 = scmp.ne.s32.totalorder %s54, %s57
      %p63 = scmp.eq.s32.totalorder %s18, 0
      %p64 = por %p62, %p63
      %p65 = scmp.ne.s32.totalorder %s54, %s57
      %p66 = scmp.eq.s32.totalorder %s23, 1
      %p67 = por %p65, %p66
      %p68 = scmp.ne.s32.totalorder %s57, %s58
      %p69 = scmp.eq.s32.totalorder %s23, 0
      %p70 = por %p68, %p69
      %p71 = scmp.ne.s32.totalorder %s57, %s58
      %p72 = scmp.eq.s32.totalorder %s24, 1
      %p73 = por %p71, %p72
      %p75 = scmp.ne.s32.totalorder %s58, %s74
      %p76 = scmp.eq.s32.totalorder %s24, 0
      %p77 = por %p75, %p76
      %p78 = scmp.le.s32.totalorder 1, %s18
      %p79 = scmp.lt.s32.totalorder %s18, 3
      %p80 = pnand %p78, %p79
      %p81 = pneg %p80
      // Predicated region
      $region9: #{tpu_custom_call.1} parent=5 // pred_check
        _
      $region10: #{tpu_custom_call.1} parent=5 // pred_check_branch
        %83 = sbr.rel (%p80) target = $region12
      $region11: #{tpu_custom_call.1} parent=5 // pred_region
        %s84 = ssub.s32 %s18, 1
      $region12: #{tpu_custom_call.1} parent=5 // pred_fallthru
        _
      %p85 = scmp.lt.s32.totalorder %s18, 2
      // Predicated region
      $region13: #{tpu_custom_call.1} parent=5 // pred_check
        %p86 = pneg %p85
      $region14: #{tpu_custom_call.1} parent=5 // pred_check_branch
        %88 = sbr.rel (%p86) target = $region16
      $region15: #{tpu_custom_call.1} parent=5 // pred_region
        // Predicated region
        $region17: #{tpu_custom_call.1} parent=15 // pred_check
          %p89 = pneg %p38
        $region18: #{tpu_custom_call.1} parent=15 // pred_check_branch
          %91 = sbr.rel (%p89) target = $region20
        $region19: #{tpu_custom_call.1} parent=15 // pred_region
          %s92 = sand.u32 %s28, 1
          %s93 = scalar_lea.sflag [#allocation5], %s92
          %s94 = sand.u32 %s28, 1
          %s95 = smul.addr %s94, 8
          %s96 = scalar_lea.vmem [#allocation4], %s95
          %s98 = ssub.s32 128, 128
          %99 = vsyncadd %s93, %s98
          %s100 = smul.addr %s18, 128
          %s101 = scalar_lea.hbm %s1, %s100
          %s103 = sshll.u32 %s96, 4
          %s104 = int_to_ptr.vmem [resolvable:$true] %s103
          %106 = dma.hbm_to_vmem [thread:$0]  %s101, 128, %s104, %s93
        $region20: #{tpu_custom_call.1} parent=15 // pred_fallthru
          _
      $region16: #{tpu_custom_call.1} parent=5 // pred_fallthru
        _
      %p107 = scmp.le.s32.totalorder 1, %s18
      %p108 = scmp.lt.s32.totalorder %s18, 3
      %p109 = pnand %p107, %p108
      %p110 = pneg %p109
      // Predicated region
      $region21: #{tpu_custom_call.1} parent=5 // pred_check
        _
      $region22: #{tpu_custom_call.1} parent=5 // pred_check_branch
        %112 = sbr.rel (%p109) target = $region24
      $region23: #{tpu_custom_call.1} parent=5 // pred_region
        %s113 = ssub.s32 %s18, 1
        %s114 = sand.u32 %s31, 1
        %s115 = scalar_lea.sflag [#allocation5], %s114
        %s116 = sand.u32 %s31, 1
        %s117 = smul.addr %s116, 8
        %s118 = scalar_lea.vmem [#allocation4], %s117
        // Predicated region
        $region25: #{tpu_custom_call.1} parent=23 // pred_check
          %p119 = pneg %p44
        $region26: #{tpu_custom_call.1} parent=23 // pred_check_branch
          %121 = sbr.rel (%p119) target = $region28
        $region27: #{tpu_custom_call.1} parent=23 // pred_region
          %122 = dma.done %s115, 128
        $region28: #{tpu_custom_call.1} parent=23 // pred_fallthru
          _
        %s123 = sand.u32 %s31, 1
        %s124 = scalar_lea.sflag [#allocation5], %s123
        %s125 = sand.u32 %s31, 1
        %s126 = smul.addr %s125, 8
        %s127 = scalar_lea.vmem [#allocation4], %s126
        %p128 = pneg %p44
        %p129 = pneg %p41
        %p130 = pneg %p70
        %p131 = pneg %p67
        %s132 = sand.u32 %s57, 1
        %s133 = scalar_lea.sflag [#allocation6], %s132
        %s134 = sand.u32 %s57, 1
        %s135 = smul.addr %s134, 8
        %s136 = scalar_lea.vmem [#allocation7], %s135
        %s137 = sld [smem:[#allocation3]]
        %s138 = sld [smem:[#allocation3 + $0x1]]
        %s139 = sld [smem:[#allocation3 + $0x2]]
        %v140 = vld [vmem:[%s118] sm:$0xff]
        %v141 = vstv %s137
        %v142 = vmul.f32 %v141, %v140
        %v143 = vmul.f32 %v142, 1.442695
        %v144 = vpow.pop %v143
        %v145 = vstv %s138
        %v146 = vmul.f32 %v145, %v144
        %v147 = vstv %s139
        %v148 = vadd.f32 %v146, %v147
        %149 = vst [vmem:[%s136] sm:$0xff] %v148
        %s150 = sand.u32 %s57, 1
        %s151 = scalar_lea.sflag [#allocation6], %s150
        %s152 = sand.u32 %s57, 1
        %s153 = smul.addr %s152, 8
        %s154 = scalar_lea.vmem [#allocation7], %s153
        // Predicated region
        $region29: #{tpu_custom_call.1} parent=23 // pred_check
          %p155 = pneg %p67
        $region30: #{tpu_custom_call.1} parent=23 // pred_check_branch
          %157 = sbr.rel (%p155) target = $region32
        $region31: #{tpu_custom_call.1} parent=23 // pred_region
          %s159 = ssub.s32 128, 128
          %160 = vsyncadd %s151, %s159
          %s161 = smul.addr %s23, 128
          %s162 = scalar_lea.hbm %s2, %s161
          %s164 = sshll.u32 %s154, 4
          %s165 = int_to_ptr.vmem [resolvable:$true] %s164
          %167 = dma.vmem_to_hbm [thread:$0]  %s165, 128, %s162, %s151
        $region32: #{tpu_custom_call.1} parent=23 // pred_fallthru
          _
      $region24: #{tpu_custom_call.1} parent=5 // pred_fallthru
        _
      %p168 = scmp.le.s32.totalorder 2, %s18
      // Predicated region
      $region33: #{tpu_custom_call.1} parent=5 // pred_check
        %p169 = pneg %p168
      $region34: #{tpu_custom_call.1} parent=5 // pred_check_branch
        %171 = sbr.rel (%p169) target = $region36
      $region35: #{tpu_custom_call.1} parent=5 // pred_region
        %s172 = ssub.s32 %s18, 2
        // Predicated region
        $region37: #{tpu_custom_call.1} parent=35 // pred_check
          %p173 = pneg %p73
        $region38: #{tpu_custom_call.1} parent=35 // pred_check_branch
          %175 = sbr.rel (%p173) target = $region40
        $region39: #{tpu_custom_call.1} parent=35 // pred_region
          %s176 = sand.u32 %s58, 1
          %s177 = scalar_lea.sflag [#allocation6], %s176
          %s178 = sand.u32 %s58, 1
          %s179 = smul.addr %s178, 8
          %s180 = scalar_lea.vmem [#allocation7], %s179
          %181 = dma.done %s177, 128
        $region40: #{tpu_custom_call.1} parent=35 // pred_fallthru
          _
      $region36: #{tpu_custom_call.1} parent=5 // pred_fallthru
        _
    $region6: #{tpu_custom_call.1} parent=1 // loop_footer
      %s22 = sadd.s32 1, %s18
    $region7: #{tpu_custom_call.1} parent=1 // loop_footer_branch
      %17 = sbr.rel target = $region3
    $region8: #{tpu_custom_call.1} parent=1 // loop_exit
      _
    %182 = vsyncpa [#allocation5], 1
    %s183 = scalar_lea.sflag [#allocation5], 1
    %184 = vsyncpa %s183, 1
    %185 = vsyncpa [#allocation6], 1
    %s186 = scalar_lea.sflag [#allocation6], 1
    %187 = vsyncpa %s186, 1

</llo_original>
